<compile_context>
chip_gen: v7x
topology: tpu7x:2x2x1
jax: 0.10.0
libtpu: 0.0.40
codegen_flags: <defaults>
</compile_context>

<pallas_src>
import functools
import math

import jax
import jax.numpy as jnp
from jax.experimental import pallas as pl
from jax.experimental.pallas import tpu as pltpu


# ----------------------------------------------------------------------------
# Helpers
# ----------------------------------------------------------------------------
_ROW_TILES = (512, 256, 128, 64, 32, 16, 8)
_FF_TILES = (512, 256, 128, 64, 32, 16, 8)
_SEQ_TILES = (256, 128, 64, 32, 16, 8)
_VMEM_LIMIT = 64 * 1024 * 1024   # explicit scoped-VMEM budget (> 16/32 MiB default)


def _pick_tile(n, candidates):
    """Largest candidate tile that divides n; fall back to full n (always legal)."""
    for c in candidates:
        if c <= n and n % c == 0:
            return c
    return n


def _cparams(dims):
    return pltpu.CompilerParams(dimension_semantics=dims,
                                vmem_limit_bytes=_VMEM_LIMIT)


def _gelu_tanh(x):
    # tanh-approx GELU; tanh routes to the EUP slot so it overlaps with MXU work.
    c = math.sqrt(2.0 / math.pi)
    return 0.5 * x * (1.0 + jnp.tanh(c * (x + 0.044715 * x * x * x)))


def _layernorm(y, g, b, eps):
    mu = jnp.mean(y, axis=-1, keepdims=True)
    c = y - mu
    var = jnp.mean(c * c, axis=-1, keepdims=True)
    return c * jax.lax.rsqrt(var + eps) * g + b


def _rope_apply(x, cos, sin_signed, num_heads, dk):
    """Interleaved RoPE on a (rows, D) tile whose per-head columns are already
    de-interleaved ([even | odd] halves, see prepare_params).  Equivalent to a
    per-head rotate-half: y = x*cos + swap_halves(x) * [-sin | +sin]."""
    half = dk // 2
    parts = []
    for h in range(num_heads):          # static unroll
        lo = h * dk
        parts.append(x[:, lo + half:lo + dk])   # odd components
        parts.append(x[:, lo:lo + half])        # even components
    x_sw = jnp.concatenate(parts, axis=-1)
    return x * cos + x_sw * sin_signed


def rope_tables(seq_len, dk, num_heads, dtype=jnp.float32):
    """Full-width (S, D) cos / signed-sin tables for the de-interleaved layout."""
    half = dk // 2
    inv_freq = 1.0 / (10000.0 ** (jnp.arange(half, dtype=jnp.float32) / half))
    t = jnp.arange(seq_len, dtype=jnp.float32)
    freqs = t[:, None] * inv_freq[None, :]                        # (S, half)
    cos = jnp.cos(freqs)
    sin = jnp.sin(freqs)
    cos_full = jnp.tile(jnp.concatenate([cos, cos], axis=-1), (1, num_heads))
    sin_signed = jnp.tile(jnp.concatenate([-sin, sin], axis=-1), (1, num_heads))
    return cos_full.astype(dtype), sin_signed.astype(dtype)


# ----------------------------------------------------------------------------
# Pallas kernels
# ----------------------------------------------------------------------------
def _qkv_rope_kernel(x_ref, wt_ref, b_ref, cos_ref, sin_ref,
                     q_ref, k_ref, v_ref, *, d_model, num_heads, dk):
    # Fused QKV projection; RoPE epilogue on the Q and K sections.
    x = x_ref[...].astype(wt_ref.dtype)
    y = jnp.dot(x, wt_ref[...], preferred_element_type=jnp.float32) + b_ref[...]
    cos = cos_ref[...]
    sin = sin_ref[...]
    D = d_model
    q_ref[...] = _rope_apply(y[:, :D], cos, sin, num_heads, dk).astype(q_ref.dtype)
    k_ref[...] = _rope_apply(y[:, D:2 * D], cos, sin, num_heads, dk).astype(k_ref.dtype)
    v_ref[...] = y[:, 2 * D:].astype(v_ref.dtype)


def _q_rope_kernel(x_ref, wt_ref, b_ref, cos_ref, sin_ref, q_ref, *, num_heads, dk):
    x = x_ref[...].astype(wt_ref.dtype)
    y = jnp.dot(x, wt_ref[...], preferred_element_type=jnp.float32) + b_ref[...]
    q_ref[...] = _rope_apply(y, cos_ref[...], sin_ref[...], num_heads, dk
                             ).astype(q_ref.dtype)


def _kv_rope_kernel(x_ref, wt_ref, b_ref, cos_ref, sin_ref, k_ref, v_ref,
                    *, d_model, num_heads, dk):
    x = x_ref[...].astype(wt_ref.dtype)
    y = jnp.dot(x, wt_ref[...], preferred_element_type=jnp.float32) + b_ref[...]
    D = d_model
    k_ref[...] = _rope_apply(y[:, :D], cos_ref[...], sin_ref[...], num_heads, dk
                             ).astype(k_ref.dtype)
    v_ref[...] = y[:, D:].astype(v_ref.dtype)


def _attn_kernel(q_ref, k_ref, v_ref, bias_ref, o_ref, *, num_heads, dk):
    # q_ref: (TQ, D) bf16; k_ref/v_ref: (Sk, D) bf16; bias_ref: (TQ, Sk) f32.
    # 1/sqrt(dk) is already folded into W_q; the mask is an additive bias.
    bias = bias_ref[...]
    q_all = q_ref[...]
    k_all = k_ref[...]
    v_all = v_ref[...]
    heads = []
    for h in range(num_heads):          # static unroll over heads
        lo = h * dk
        s = jax.lax.dot_general(
            q_all[:, lo:lo + dk], k_all[:, lo:lo + dk],
            (((1,), (1,)), ((), ())), preferred_element_type=jnp.float32) + bias
        s = s - jnp.max(s, axis=-1, keepdims=True)
        p = jnp.exp(s)
        p = p * pl.reciprocal(jnp.sum(p, axis=-1, keepdims=True), approx=True)
        heads.append(jnp.dot(p.astype(v_all.dtype), v_all[:, lo:lo + dk],
                             preferred_element_type=jnp.float32))
    # single lane-dense store (no per-head masked partial stores)
    o_ref[...] = jnp.concatenate(heads, axis=-1).astype(o_ref.dtype)


def _linear_add_ln_kernel(x_ref, wt_ref, b_ref, r_ref, g_ref, beta_ref, o_ref, *, eps):
    # o = LayerNorm(residual + (x @ Wt + b))   -- fused O-projection epilogue
    x = x_ref[...].astype(wt_ref.dtype)
    y = (jnp.dot(x, wt_ref[...], preferred_element_type=jnp.float32)
         + b_ref[...] + r_ref[...])
    o_ref[...] = _layernorm(y, g_ref[...], beta_ref[...], eps)


def _ffn_add_ln_kernel(x_ref, w1t_ref, b1_ref, w2t_ref, b2_ref, g_ref, beta_ref,
                       o_ref, acc_ref, *, eps):
    # Fused position-wise FFN + residual + LayerNorm; d_ff tiled on grid axis 1
    # (reduction) with an f32 accumulator in VMEM scratch.
    k = pl.program_id(1)

    @pl.when(k == 0)
    def _init():
        acc_ref[...] = jnp.zeros_like(acc_ref)

    x = x_ref[...].astype(w1t_ref.dtype)
    h = jnp.dot(x, w1t_ref[...], preferred_element_type=jnp.float32) + b1_ref[...]
    h = _gelu_tanh(h)
    acc_ref[...] += jnp.dot(h.astype(w2t_ref.dtype), w2t_ref[...],
                            preferred_element_type=jnp.float32)

    @pl.when(k == pl.num_programs(1) - 1)
    def _finalize():
        y = acc_ref[...] + b2_ref[...] + x_ref[...]   # residual is the FFN input
        o_ref[...] = _layernorm(y, g_ref[...], beta_ref[...], eps)


# ----------------------------------------------------------------------------
# Pallas wrappers
# ----------------------------------------------------------------------------
def qkv_project_rope(x, p, cos, sin, num_heads):
    """x: (B,S,D) f32 -> q, k, v: (B,S,D) bf16 (q/k rotated, de-interleaved heads)."""
    B, S, D = x.shape
    N = B * S
    dk = D // num_heads
    tm = _pick_tile(S, _ROW_TILES)   # tm | S so RoPE blocks align with positions
    n_sblk = S // tm
    bf = jax.ShapeDtypeStruct((N, D), jnp.bfloat16)
    q, k, v = pl.pallas_call(
        functools.partial(_qkv_rope_kernel, d_model=D, num_heads=num_heads, dk=dk),
        out_shape=(bf, bf, bf),
        grid=(N // tm,),
        in_specs=[
            pl.BlockSpec((tm, D), lambda i: (i, 0)),
            pl.BlockSpec((D, 3 * D), lambda i: (0, 0)),
            pl.BlockSpec((1, 3 * D), lambda i: (0, 0)),
            pl.BlockSpec((tm, D), lambda i: (i % n_sblk, 0)),
            pl.BlockSpec((tm, D), lambda i: (i % n_sblk, 0)),
        ],
        out_specs=(
            pl.BlockSpec((tm, D), lambda i: (i, 0)),
            pl.BlockSpec((tm, D), lambda i: (i, 0)),
            pl.BlockSpec((tm, D), lambda i: (i, 0)),
        ),
        compiler_params=_cparams(("parallel",)),
    )(x.reshape(N, D), p["wqkv_t"], p["bqkv"], cos, sin)
    return q.reshape(B, S, D), k.reshape(B, S, D), v.reshape(B, S, D)


def q_project_rope(x, p, cos, sin, num_heads):
    B, S, D = x.shape
    N = B * S
    dk = D // num_heads
    tm = _pick_tile(S, _ROW_TILES)
    n_sblk = S // tm
    q = pl.pallas_call(
        functools.partial(_q_rope_kernel, num_heads=num_heads, dk=dk),
        out_shape=jax.ShapeDtypeStruct((N, D), jnp.bfloat16),
        grid=(N // tm,),
        in_specs=[
            pl.BlockSpec((tm, D), lambda i: (i, 0)),
            pl.BlockSpec((D, D), lambda i: (0, 0)),
            pl.BlockSpec((1, D), lambda i: (0, 0)),
            pl.BlockSpec((tm, D), lambda i: (i % n_sblk, 0)),
            pl.BlockSpec((tm, D), lambda i: (i % n_sblk, 0)),
        ],
        out_specs=pl.BlockSpec((tm, D), lambda i: (i, 0)),
        compiler_params=_cparams(("parallel",)),
    )(x.reshape(N, D), p["wq_t"], p["bq"], cos, sin)
    return q.reshape(B, S, D)


def kv_project_rope(x, p, cos, sin, num_heads):
    B, S, D = x.shape
    N = B * S
    dk = D // num_heads
    tm = _pick_tile(S, _ROW_TILES)
    n_sblk = S // tm
    bf = jax.ShapeDtypeStruct((N, D), jnp.bfloat16)
    k, v = pl.pallas_call(
        functools.partial(_kv_rope_kernel, d_model=D, num_heads=num_heads, dk=dk),
        out_shape=(bf, bf),
        grid=(N // tm,),
        in_specs=[
            pl.BlockSpec((tm, D), lambda i: (i, 0)),
            pl.BlockSpec((D, 2 * D), lambda i: (0, 0)),
            pl.BlockSpec((1, 2 * D), lambda i: (0, 0)),
            pl.BlockSpec((tm, D), lambda i: (i % n_sblk, 0)),
            pl.BlockSpec((tm, D), lambda i: (i % n_sblk, 0)),
        ],
        out_specs=(
            pl.BlockSpec((tm, D), lambda i: (i, 0)),
            pl.BlockSpec((tm, D), lambda i: (i, 0)),
        ),
        compiler_params=_cparams(("parallel",)),
    )(x.reshape(N, D), p["wkv_t"], p["bkv"], cos, sin)
    return k.reshape(B, S, D), v.reshape(B, S, D)


def attention_core(q, k, v, bias, num_heads):
    """q: (B,Sq,D) bf16; k,v: (B,Sk,D) bf16; bias: (1|B,Sq,Sk) f32 additive mask."""
    B, Sq, D = q.shape
    Sk = k.shape[1]
    dk = D // num_heads
    tq = _pick_tile(Sq, _SEQ_TILES)
    has_batch = bias.shape[0] != 1
    bias_idx = (lambda b, i: (b, i, 0)) if has_batch else (lambda b, i: (0, i, 0))
    # TODO(synk): for very long Sk on v7x (64 MiB VMEM), tile Sk with a
    # flash-style online-softmax accumulator instead of keeping full K/V resident.
    return pl.pallas_call(
        functools.partial(_attn_kernel, num_heads=num_heads, dk=dk),
        out_shape=jax.ShapeDtypeStruct((B, Sq, D), jnp.bfloat16),
        grid=(B, Sq // tq),
        in_specs=[
            pl.BlockSpec((None, tq, D), lambda b, i: (b, i, 0)),
            pl.BlockSpec((None, Sk, D), lambda b, i: (b, 0, 0)),
            pl.BlockSpec((None, Sk, D), lambda b, i: (b, 0, 0)),
            pl.BlockSpec((None, tq, Sk), bias_idx),
        ],
        out_specs=pl.BlockSpec((None, tq, D), lambda b, i: (b, i, 0)),
        compiler_params=_cparams(("parallel", "parallel")),
    )(q, k, v, bias)


def linear_add_ln(x2d, wt, b, residual2d, gamma, beta, eps=1e-5):
    """LayerNorm(residual + x2d @ wt + b).  Row-tiled, bf16 weights, f32 out."""
    N, d_in = x2d.shape
    d_out = wt.shape[1]
    tm = _pick_tile(N, _ROW_TILES)
    return pl.pallas_call(
        functools.partial(_linear_add_ln_kernel, eps=eps),
        out_shape=jax.ShapeDtypeStruct((N, d_out), jnp.float32),
        grid=(N // tm,),
        in_specs=[
            pl.BlockSpec((tm, d_in), lambda i: (i, 0)),
            pl.BlockSpec((d_in, d_out), lambda i: (0, 0)),
            pl.BlockSpec((1, d_out), lambda i: (0, 0)),
            pl.BlockSpec((tm, d_out), lambda i: (i, 0)),
            pl.BlockSpec((1, d_out), lambda i: (0, 0)),
            pl.BlockSpec((1, d_out), lambda i: (0, 0)),
        ],
        out_specs=pl.BlockSpec((tm, d_out), lambda i: (i, 0)),
        compiler_params=_cparams(("parallel",)),
    )(x2d, wt, b, residual2d, gamma, beta)


def ffn_add_ln(x2d, ffp, gamma, beta, eps=1e-5):
    """LayerNorm(x + fc2(gelu(fc1(x)))), d_ff tiled on a reduction grid axis."""
    N, D = x2d.shape
    d_ff = ffp["w1t"].shape[1]
    tm = _pick_tile(N, _ROW_TILES)   # cap raised to 512: fewer W1/W2 re-streams
    tf = _pick_tile(d_ff, _FF_TILES)
    return pl.pallas_call(
        functools.partial(_ffn_add_ln_kernel, eps=eps),
        out_shape=jax.ShapeDtypeStruct((N, D), jnp.float32),
        grid=(N // tm, d_ff // tf),
        in_specs=[
            pl.BlockSpec((tm, D), lambda i, k: (i, 0)),     # x (also the residual)
            pl.BlockSpec((D, tf), lambda i, k: (0, k)),     # W1^T slice
            pl.BlockSpec((1, tf), lambda i, k: (0, k)),     # b1 slice
            pl.BlockSpec((tf, D), lambda i, k: (k, 0)),     # W2^T slice
            pl.BlockSpec((1, D), lambda i, k: (0, 0)),      # b2
            pl.BlockSpec((1, D), lambda i, k: (0, 0)),      # gamma
            pl.BlockSpec((1, D), lambda i, k: (0, 0)),      # beta
        ],
        out_specs=pl.BlockSpec((tm, D), lambda i, k: (i, 0)),
        scratch_shapes=[pltpu.VMEM((tm, D), jnp.float32)],
        compiler_params=_cparams(("parallel", "arbitrary")),
    )(x2d, ffp["w1t"], ffp["b1"], ffp["w2t"], ffp["b2"], gamma, beta)


# ----------------------------------------------------------------------------
# Module forward
# ----------------------------------------------------------------------------
def decoder_layer_rotary(params, x, enc_output, src_mask, tgt_mask, num_heads):
    # dropout is a no-op (inference / p=0 semantics)
    B, S, D = x.shape
    Se = enc_output.shape[1]
    dk = D // num_heads
    N = B * S
    x2d = x.reshape(N, D)

    cos_t, sin_t = rope_tables(S, dk, num_heads)    # target-side positions
    cos_e, sin_e = rope_tables(Se, dk, num_heads)   # encoder-side positions

    # additive mask bias == masked_fill(mask==0, -1e30) in f32
    tgt_bias = jnp.where(tgt_mask == 0, -1e30, 0.0).astype(jnp.float32)
    src_bias = jnp.where(src_mask == 0, -1e30, 0.0).astype(jnp.float32)

    # --- self-attention + fused (O-proj + residual + LayerNorm1) ---
    q, k, v = qkv_project_rope(x, params["self_attn"], cos_t, sin_t, num_heads)
    sa = attention_core(q, k, v, tgt_bias, num_heads)            # (B,S,D) bf16
    x2d = linear_add_ln(sa.reshape(N, D), params["self_attn"]["wo_t"],
                        params["self_attn"]["bo"], x2d,
                        params["norm1"]["g"], params["norm1"]["b"])
    x = x2d.reshape(B, S, D)

    # --- cross-attention + fused (O-proj + residual + LayerNorm2) ---
    q = q_project_rope(x, params["cross_attn"], cos_t, sin_t, num_heads)
    k, v = kv_project_rope(enc_output, params["cross_attn"], cos_e, sin_e, num_heads)
    ca = attention_core(q, k, v, src_bias, num_heads)            # (B,S,D) bf16
    x2d = linear_add_ln(ca.reshape(N, D), params["cross_attn"]["wo_t"],
                        params["cross_attn"]["bo"], x2d,
                        params["norm2"]["g"], params["norm2"]["b"])

    # --- fused FFN + residual + LayerNorm3 (d_ff tiled reduction) ---
    x2d = ffn_add_ln(x2d, params["ff"], params["norm3"]["g"], params["norm3"]["b"])
    return x2d.reshape(B, S, D)


# ----------------------------------------------------------------------------
# Parameter init (PyTorch nn.Linear-style bounds) + one-time layout prep
# ----------------------------------------------------------------------------
def _init_linear(key, d_in, d_out):
    kw, kb = jax.random.split(key)
    bound = 1.0 / math.sqrt(d_in)
    W = jax.random.uniform(kw, (d_out, d_in), jnp.float32, -bound, bound)
    b = jax.random.uniform(kb, (d_out,), jnp.float32, -bound, bound)
    return W, b


def _init_attn(key, d_model):
    ks = jax.random.split(key, 4)
    Wq, bq = _init_linear(ks[0], d_model, d_model)
    Wk, bk = _init_linear(ks[1], d_model, d_model)
    Wv, bv = _init_linear(ks[2], d_model, d_model)
    Wo, bo = _init_linear(ks[3], d_model, d_model)
    return dict(Wq=Wq, bq=bq, Wk=Wk, bk=bk, Wv=Wv, bv=bv, Wo=Wo, bo=bo)


def init_params(key, d_model, d_ff):
    k1, k2, k3, k4 = jax.random.split(key, 4)
    W1, b1 = _init_linear(k3, d_model, d_ff)
    W2, b2 = _init_linear(k4, d_ff, d_model)
    ln = lambda: dict(g=jnp.ones((d_model,), jnp.float32),
                      b=jnp.zeros((d_model,), jnp.float32))
    return dict(self_attn=_init_attn(k1, d_model),
                cross_attn=_init_attn(k2, d_model),
                ff=dict(W1=W1, b1=b1, W2=W2, b2=b2),
                norm1=ln(), norm2=ln(), norm3=ln())


def _deinterleave_perm(d_model, num_heads):
    """Per-head column permutation: even (0,2,4,...) components first, odd second."""
    dk = d_model // num_heads
    half = dk // 2
    perm = []
    for h in range(num_heads):
        lo = h * dk
        perm += [lo + 2 * j for j in range(half)]
        perm += [lo + 2 * j + 1 for j in range(half)]
    return jnp.asarray(perm, dtype=jnp.int32)


def prepare_params(p, num_heads):
    """One-time conversion of PyTorch-layout params (W: (d_out, d_in), f32) into
    kernel layouts: pre-transposed (d_in, d_out) bf16 weights, fused QKV / KV
    blocks, per-head de-interleaved Q/K output columns (so interleaved RoPE is a
    rotate-half epilogue inside the projection kernel), 1/sqrt(dk) folded into
    W_q / b_q, 2-D f32 biases & LN params.  No per-call transposes."""
    d_model = p["self_attn"]["Wq"].shape[0]
    dk = d_model // num_heads
    perm = _deinterleave_perm(d_model, num_heads)
    scale = 1.0 / math.sqrt(dk)

    def prep_attn(a):
        wq_t = (a["Wq"].T * scale)[:, perm].astype(jnp.bfloat16)
        bq = (a["bq"] * scale)[perm].reshape(1, -1)
        wk_t = a["Wk"].T[:, perm].astype(jnp.bfloat16)
        bk = a["bk"][perm].reshape(1, -1)
        wv_t = a["Wv"].T.astype(jnp.bfloat16)
        bv = a["bv"].reshape(1, -1)
        return dict(
            wqkv_t=jnp.concatenate([wq_t, wk_t, wv_t], axis=1),
            bqkv=jnp.concatenate([bq, bk, bv], axis=1),
            wq_t=wq_t, bq=bq,
            wkv_t=jnp.concatenate([wk_t, wv_t], axis=1),
            bkv=jnp.concatenate([bk, bv], axis=1),
            wo_t=a["Wo"].T.astype(jnp.bfloat16),
            bo=a["bo"].reshape(1, -1),
        )

    ln = lambda n: dict(g=p[n]["g"].reshape(1, -1), b=p[n]["b"].reshape(1, -1))
    return dict(
        self_attn=prep_attn(p["self_attn"]),
        cross_attn=prep_attn(p["cross_attn"]),
        ff=dict(w1t=p["ff"]["W1"].T.astype(jnp.bfloat16),
                b1=p["ff"]["b1"].reshape(1, -1),
                w2t=p["ff"]["W2"].T.astype(jnp.bfloat16),
                b2=p["ff"]["b2"].reshape(1, -1)),
        norm1=ln("norm1"), norm2=ln("norm2"), norm3=ln("norm3"),
    )


# ----------------------------------------------------------------------------
if __name__ == "__main__":
    B, S, D_MODEL, NUM_HEADS, D_FF = 2, 8, 32, 4, 64

    key = jax.random.PRNGKey(0)
    kp, kx, ke = jax.random.split(key, 3)

    params = prepare_params(init_params(kp, D_MODEL, D_FF), NUM_HEADS)
    x = jax.random.normal(kx, (B, S, D_MODEL), jnp.float32)
    enc_output = jax.random.normal(ke, (B, S, D_MODEL), jnp.float32)

    # tgt_mask: causal; src_mask: all ones (both broadcast over batch).
    tgt_mask = jnp.tril(jnp.ones((S, S), jnp.float32))[None]   # (1, S, S)
    src_mask = jnp.ones((1, S, S), jnp.float32)                # (1, S, S)

    out = decoder_layer_rotary(params, x, enc_output, src_mask, tgt_mask, NUM_HEADS)
    out = jax.block_until_ready(out)

    assert out.shape == (B, S, D_MODEL)
    assert bool(jnp.all(jnp.isfinite(out)))
    print("KERNEL_OK")
</pallas_src>

<mosaic_0001>
module attributes {stable_mosaic.version = 11 : i64} {
  func.func @_qkv_rope_kernel(%arg0: i32, %arg1: memref<8x32xf32, #tpu.memory_space<vmem>>, %arg2: memref<32x96xbf16, #tpu.memory_space<vmem>>, %arg3: memref<1x96xf32, #tpu.memory_space<vmem>>, %arg4: memref<8x32xf32, #tpu.memory_space<vmem>>, %arg5: memref<8x32xf32, #tpu.memory_space<vmem>>, %arg6: memref<8x32xbf16, #tpu.memory_space<vmem>>, %arg7: memref<8x32xbf16, #tpu.memory_space<vmem>>, %arg8: memref<8x32xbf16, #tpu.memory_space<vmem>>) attributes {dimension_semantics = [#tpu.dimension_semantics<parallel>], iteration_bounds = array<i64: 2>, scalar_prefetch = 0 : i64, scratch_operands = 0 : i64, tpu.core_type = #tpu.core_type<tc>, window_params = [{transform_indices = @transform_0, window_bounds = array<i64: 8, 32>}, {pipeline_mode = #tpu.pipeline_mode<synchronous>, transform_indices = @transform_1, window_bounds = array<i64: 32, 96>}, {pipeline_mode = #tpu.pipeline_mode<synchronous>, transform_indices = @transform_2, window_bounds = array<i64: 1, 96>}, {transform_indices = @transform_3, window_bounds = array<i64: 8, 32>}, {transform_indices = @transform_4, window_bounds = array<i64: 8, 32>}, {transform_indices = @transform_5, window_bounds = array<i64: 8, 32>}, {transform_indices = @transform_6, window_bounds = array<i64: 8, 32>}, {transform_indices = @transform_7, window_bounds = array<i64: 8, 32>}]} {
    %c0 = arith.constant 0 : index
    %c0_0 = arith.constant 0 : index
    %0 = vector.load %arg1[%c0, %c0_0] : memref<8x32xf32, #tpu.memory_space<vmem>>, vector<8x32xf32>
    %1 = arith.truncf %0 : vector<8x32xf32> to vector<8x32xbf16>
    %c0_1 = arith.constant 0 : index
    %c0_2 = arith.constant 0 : index
    %2 = vector.load %arg2[%c0_1, %c0_2] : memref<32x96xbf16, #tpu.memory_space<vmem>>, vector<32x96xbf16>
    %cst = arith.constant dense<0.000000e+00> : vector<8x96xf32>
    %3 = tpu.matmul %1, %2, %cst {dimension_numbers = #tpu.dot_dimension_numbers<[1], [0], [0], [1], [0, 0, 1, 1], [], []>} : vector<8x32xbf16>, vector<32x96xbf16>, vector<8x96xf32> -> vector<8x96xf32>
    %c0_3 = arith.constant 0 : index
    %c0_4 = arith.constant 0 : index
    %4 = vector.load %arg3[%c0_3, %c0_4] : memref<1x96xf32, #tpu.memory_space<vmem>>, vector<1x96xf32>
    %5 = vector.broadcast %4 : vector<1x96xf32> to vector<8x96xf32>
    %6 = arith.addf %3, %5 : vector<8x96xf32>
    %c0_5 = arith.constant 0 : index
    %c0_6 = arith.constant 0 : index
    %7 = vector.load %arg4[%c0_5, %c0_6] : memref<8x32xf32, #tpu.memory_space<vmem>>, vector<8x32xf32>
    %c0_7 = arith.constant 0 : index
    %c0_8 = arith.constant 0 : index
    %8 = vector.load %arg5[%c0_7, %c0_8] : memref<8x32xf32, #tpu.memory_space<vmem>>, vector<8x32xf32>
    %9 = vector.extract_strided_slice %6 {offsets = [0, 0], sizes = [8, 32], strides = [1, 1]} : vector<8x96xf32> to vector<8x32xf32>
    %10 = vector.extract_strided_slice %9 {offsets = [0, 4], sizes = [8, 4], strides = [1, 1]} : vector<8x32xf32> to vector<8x4xf32>
    %11 = vector.extract_strided_slice %9 {offsets = [0, 0], sizes = [8, 4], strides = [1, 1]} : vector<8x32xf32> to vector<8x4xf32>
    %12 = vector.extract_strided_slice %9 {offsets = [0, 12], sizes = [8, 4], strides = [1, 1]} : vector<8x32xf32> to vector<8x4xf32>
    %13 = vector.extract_strided_slice %9 {offsets = [0, 8], sizes = [8, 4], strides = [1, 1]} : vector<8x32xf32> to vector<8x4xf32>
    %14 = vector.extract_strided_slice %9 {offsets = [0, 20], sizes = [8, 4], strides = [1, 1]} : vector<8x32xf32> to vector<8x4xf32>
    %15 = vector.extract_strided_slice %9 {offsets = [0, 16], sizes = [8, 4], strides = [1, 1]} : vector<8x32xf32> to vector<8x4xf32>
    %16 = vector.extract_strided_slice %9 {offsets = [0, 28], sizes = [8, 4], strides = [1, 1]} : vector<8x32xf32> to vector<8x4xf32>
    %17 = vector.extract_strided_slice %9 {offsets = [0, 24], sizes = [8, 4], strides = [1, 1]} : vector<8x32xf32> to vector<8x4xf32>
    %18 = tpu.concatenate %10, %11, %12, %13, %14, %15, %16, %17 in 1 : vector<8x4xf32>, vector<8x4xf32>, vector<8x4xf32>, vector<8x4xf32>, vector<8x4xf32>, vector<8x4xf32>, vector<8x4xf32>, vector<8x4xf32> -> vector<8x32xf32>
    %19 = arith.mulf %9, %7 : vector<8x32xf32>
    %20 = arith.mulf %18, %8 : vector<8x32xf32>
    %21 = arith.addf %19, %20 : vector<8x32xf32>
    %22 = arith.truncf %21 : vector<8x32xf32> to vector<8x32xbf16>
    %c0_9 = arith.constant 0 : index
    %c0_10 = arith.constant 0 : index
    %23 = vector.load %arg6[%c0_9, %c0_10] : memref<8x32xbf16, #tpu.memory_space<vmem>>, vector<8x32xbf16>
    tpu.vector_store %arg6[%c0_9, %c0_10], %22 {strides = array<i32>} : memref<8x32xbf16, #tpu.memory_space<vmem>>, vector<8x32xbf16>,
    %24 = vector.extract_strided_slice %6 {offsets = [0, 32], sizes = [8, 32], strides = [1, 1]} : vector<8x96xf32> to vector<8x32xf32>
    %25 = vector.extract_strided_slice %24 {offsets = [0, 4], sizes = [8, 4], strides = [1, 1]} : vector<8x32xf32> to vector<8x4xf32>
    %26 = vector.extract_strided_slice %24 {offsets = [0, 0], sizes = [8, 4], strides = [1, 1]} : vector<8x32xf32> to vector<8x4xf32>
    %27 = vector.extract_strided_slice %24 {offsets = [0, 12], sizes = [8, 4], strides = [1, 1]} : vector<8x32xf32> to vector<8x4xf32>
    %28 = vector.extract_strided_slice %24 {offsets = [0, 8], sizes = [8, 4], strides = [1, 1]} : vector<8x32xf32> to vector<8x4xf32>
    %29 = vector.extract_strided_slice %24 {offsets = [0, 20], sizes = [8, 4], strides = [1, 1]} : vector<8x32xf32> to vector<8x4xf32>
    %30 = vector.extract_strided_slice %24 {offsets = [0, 16], sizes = [8, 4], strides = [1, 1]} : vector<8x32xf32> to vector<8x4xf32>
    %31 = vector.extract_strided_slice %24 {offsets = [0, 28], sizes = [8, 4], strides = [1, 1]} : vector<8x32xf32> to vector<8x4xf32>
    %32 = vector.extract_strided_slice %24 {offsets = [0, 24], sizes = [8, 4], strides = [1, 1]} : vector<8x32xf32> to vector<8x4xf32>
    %33 = tpu.concatenate %25, %26, %27, %28, %29, %30, %31, %32 in 1 : vector<8x4xf32>, vector<8x4xf32>, vector<8x4xf32>, vector<8x4xf32>, vector<8x4xf32>, vector<8x4xf32>, vector<8x4xf32>, vector<8x4xf32> -> vector<8x32xf32>
    %34 = arith.mulf %24, %7 : vector<8x32xf32>
    %35 = arith.mulf %33, %8 : vector<8x32xf32>
    %36 = arith.addf %34, %35 : vector<8x32xf32>
    %37 = arith.truncf %36 : vector<8x32xf32> to vector<8x32xbf16>
    %c0_11 = arith.constant 0 : index
    %c0_12 = arith.constant 0 : index
    %38 = vector.load %arg7[%c0_11, %c0_12] : memref<8x32xbf16, #tpu.memory_space<vmem>>, vector<8x32xbf16>
    tpu.vector_store %arg7[%c0_11, %c0_12], %37 {strides = array<i32>} : memref<8x32xbf16, #tpu.memory_space<vmem>>, vector<8x32xbf16>,
    %39 = vector.extract_strided_slice %6 {offsets = [0, 64], sizes = [8, 32], strides = [1, 1]} : vector<8x96xf32> to vector<8x32xf32>
    %40 = arith.truncf %39 : vector<8x32xf32> to vector<8x32xbf16>
    %c0_13 = arith.constant 0 : index
    %c0_14 = arith.constant 0 : index
    %41 = vector.load %arg8[%c0_13, %c0_14] : memref<8x32xbf16, #tpu.memory_space<vmem>>, vector<8x32xbf16>
    tpu.vector_store %arg8[%c0_13, %c0_14], %40 {strides = array<i32>} : memref<8x32xbf16, #tpu.memory_space<vmem>>, vector<8x32xbf16>,
    return
  }
  func.func @transform_0(%arg0: i32) -> (i32, i32) {
    %c0_i32 = arith.constant 0 : i32
    %c0_i32_0 = arith.constant 0 : i32
    return %arg0, %c0_i32 : i32, i32
  }
  func.func @transform_1(%arg0: i32) -> (i32, i32) {
    %c0_i32 = arith.constant 0 : i32
    %c0_i32_0 = arith.constant 0 : i32
    %c0_i32_1 = arith.constant 0 : i32
    return %c0_i32, %c0_i32_0 : i32, i32
  }
  func.func @transform_2(%arg0: i32) -> (i32, i32) {
    %c0_i32 = arith.constant 0 : i32
    %c0_i32_0 = arith.constant 0 : i32
    %c0_i32_1 = arith.constant 0 : i32
    return %c0_i32, %c0_i32_0 : i32, i32
  }
  func.func @transform_3(%arg0: i32) -> (i32, i32) {
    %c1_i32 = arith.constant 1 : i32
    %c0_i32 = arith.constant 0 : i32
    %0 = arith.cmpi eq, %c1_i32, %c0_i32 : i32
    %c1_i32_0 = arith.constant 1 : i32
    %1 = arith.select %0, %c1_i32_0, %c1_i32 : i32
    %2 = arith.remsi %arg0, %1 : i32
    %c0_i32_1 = arith.constant 0 : i32
    %3 = arith.cmpi ne, %2, %c0_i32_1 : i32
    %c0_i32_2 = arith.constant 0 : i32
    %4 = arith.cmpi slt, %2, %c0_i32_2 : i32
    %c0_i32_3 = arith.constant 0 : i32
    %5 = arith.cmpi slt, %1, %c0_i32_3 : i32
    %6 = arith.xori %4, %5 : i1
    %7 = arith.andi %6, %3 : i1
    %8 = arith.addi %2, %1 : i32
    %9 = arith.select %7, %8, %2 : i32
    %c0_i32_4 = arith.constant 0 : i32
    %c0_i32_5 = arith.constant 0 : i32
    return %9, %c0_i32_4 : i32, i32
  }
  func.func @transform_4(%arg0: i32) -> (i32, i32) {
    %c1_i32 = arith.constant 1 : i32
    %c0_i32 = arith.constant 0 : i32
    %0 = arith.cmpi eq, %c1_i32, %c0_i32 : i32
    %c1_i32_0 = arith.constant 1 : i32
    %1 = arith.select %0, %c1_i32_0, %c1_i32 : i32
    %2 = arith.remsi %arg0, %1 : i32
    %c0_i32_1 = arith.constant 0 : i32
    %3 = arith.cmpi ne, %2, %c0_i32_1 : i32
    %c0_i32_2 = arith.constant 0 : i32
    %4 = arith.cmpi slt, %2, %c0_i32_2 : i32
    %c0_i32_3 = arith.constant 0 : i32
    %5 = arith.cmpi slt, %1, %c0_i32_3 : i32
    %6 = arith.xori %4, %5 : i1
    %7 = arith.andi %6, %3 : i1
    %8 = arith.addi %2, %1 : i32
    %9 = arith.select %7, %8, %2 : i32
    %c0_i32_4 = arith.constant 0 : i32
    %c0_i32_5 = arith.constant 0 : i32
    return %9, %c0_i32_4 : i32, i32
  }
  func.func @transform_5(%arg0: i32) -> (i32, i32) {
    %c0_i32 = arith.constant 0 : i32
    %c0_i32_0 = arith.constant 0 : i32
    return %arg0, %c0_i32 : i32, i32
  }
  func.func @transform_6(%arg0: i32) -> (i32, i32) {
    %c0_i32 = arith.constant 0 : i32
    %c0_i32_0 = arith.constant 0 : i32
    return %arg0, %c0_i32 : i32, i32
  }
  func.func @transform_7(%arg0: i32) -> (i32, i32) {
    %c0_i32 = arith.constant 0 : i32
    %c0_i32_0 = arith.constant 0 : i32
    return %arg0, %c0_i32 : i32, i32
  }
}

</mosaic_0001>

<llo_original>
// kernel: tpu_custom_call.1
$region0: #{tpu_custom_call.1}
  #allocation0 [shape = 'u32[]', space=smem, size = 0x4, offset = 0x4, fixed_abs, tag = 'smem constant byte address 0x4 - core index']
  #allocation1 [shape = 'u32[144,128]{1,0:T(1,128)}', space=vmem, size = 0x12000, scoped, tag = 'internal scratch']
  %s0 = inlined_call_operand.hbm [shape: f32[16,32], index: 0, kind: input, shape index: {}]
  %s1 = inlined_call_operand.hbm [shape: bf16[32,96], index: 1, kind: input, shape index: {}]
  %s2 = inlined_call_operand.hbm [shape: f32[1,96], index: 2, kind: input, shape index: {}]
  %s3 = inlined_call_operand.hbm [shape: f32[8,32], index: 3, kind: input, shape index: {}]
  %s4 = inlined_call_operand.hbm [shape: f32[8,32], index: 4, kind: input, shape index: {}]
  %s5 = inlined_call_operand.hbm [shape: bf16[16,32], index: 5, kind: output, shape index: {0}]
  %s6 = inlined_call_operand.hbm [shape: bf16[16,32], index: 6, kind: output, shape index: {1}]
  %s7 = inlined_call_operand.hbm [shape: bf16[16,32], index: 7, kind: output, shape index: {2}]
  %8 = xla_tuple %s5, %s6, %s7
  %s9 = sld [smem:[#allocation0]]
  $region89: #{tpu_custom_call.1} parent=0
    _
  %s11 = ssub.s32 1, %s9
  %s12 = scalar_select 0, %s11, %s9
  $region1: #{tpu_custom_call.1} parent=0
    #allocation2 [shape = 'u8[8192]{0}', space=vmem, size = 0x2000, scoped, tag = 'input window, operand 0']
    #allocation3 [shape = 's32[2]{0}', space=sflag, size = 0x8, scoped, tag = 'scoped memory for tpu_custom_call.1']
    #allocation4 [shape = 's32[2]{0}', space=sflag, size = 0x8, scoped, tag = 'scoped memory for tpu_custom_call.1']
    #allocation5 [shape = 'u8[8192]{0}', space=vmem, size = 0x2000, scoped, tag = 'input window, operand 1, single buffered']
    #allocation6 [shape = 's32[1]{0}', space=sflag, size = 0x4, scoped, tag = 'scoped memory for tpu_custom_call.1']
    #allocation7 [shape = 'u8[512]{0}', space=vmem, size = 0x400, scoped, tag = 'input window, operand 2, single buffered']
    #allocation8 [shape = 'u8[4096]{0}', space=vmem, size = 0x1000, scoped, tag = 'input window, operand 3, single buffered']
    #allocation9 [shape = 's32[1]{0}', space=sflag, size = 0x4, scoped, tag = 'scoped memory for tpu_custom_call.1']
    #allocation10 [shape = 'u8[4096]{0}', space=vmem, size = 0x1000, scoped, tag = 'input window, operand 4, single buffered']
    #allocation11 [shape = 'u8[4096]{0}', space=vmem, size = 0x1000, scoped, tag = 'output window, operand 0']
    #allocation12 [shape = 'u8[4096]{0}', space=vmem, size = 0x1000, scoped, tag = 'output window, operand 1']
    #allocation13 [shape = 's32[2]{0}', space=sflag, size = 0x8, scoped, tag = 'scoped memory for tpu_custom_call.1']
    #allocation14 [shape = 'u8[4096]{0}', space=vmem, size = 0x1000, scoped, tag = 'output window, operand 2']
    %13 = vsyncpa [#allocation3], 0
    %s14 = scalar_lea.sflag [#allocation3], 1
    %15 = vsyncpa %s14, 0
    %16 = vsyncpa [#allocation6], 0
    %17 = vsyncpa [#allocation9], 0
    %18 = vsyncpa [#allocation4], 0
    %s19 = scalar_lea.sflag [#allocation4], 1
    %20 = vsyncpa %s19, 0
    %21 = vsyncpa [#allocation13], 0
    %s22 = scalar_lea.sflag [#allocation13], 1
    %23 = vsyncpa %s22, 0
    loop: start=0, step=1, limit=4
    $region2: #{tpu_custom_call.1} parent=1 // loop_pre_header
      _
    $region3: #{tpu_custom_call.1} parent=1 // loop_header
      %s25 = sphi 0, %s29
      %p26 = scmp.ge.s32.totalorder %s25, 4
      %s35 = sphi 0, %s37
      %s38 = sphi 0, %s35
      %s39 = sphi 0, %s38
      %s55 = sphi 0, %s39
      %s59 = sphi 0, %s59
      %s61 = sphi 0, %s59
      %s62 = sphi 0, %s61
      %s76 = sphi 0, %s62
      %s80 = sphi 0, %s80
      %s82 = sphi 0, %s80
      %s83 = sphi 0, %s82
      %s97 = sphi 0, %s83
      %s101 = sphi 0, %s101
      %s103 = sphi 0, %s101
      %s104 = sphi 0, %s103
      %s118 = sphi 0, %s104
      %s122 = sphi 0, %s122
      %s124 = sphi 0, %s122
      %s125 = sphi 0, %s124
      %s139 = sphi 0, %s125
      %s145 = sphi 0, %s147
      %s148 = sphi 0, %s145
      %s149 = sphi 0, %s148
      %s165 = sphi 0, %s149
      %s171 = sphi 0, %s173
      %s174 = sphi 0, %s171
      %s175 = sphi 0, %s174
      %s191 = sphi 0, %s175
      %s197 = sphi 0, %s199
      %s200 = sphi 0, %s197
      %s201 = sphi 0, %s200
      %s217 = sphi 0, %s201
    $region4: #{tpu_custom_call.1} parent=1 // loop_header_branch
      %28 = sbr.rel (%p26) target = $region8
    $region5: #{tpu_custom_call.1} parent=1 // loop_body
      %s30 = ssub.s32 %s25, 1
      %s31 = ssub.s32 %s25, 2
      %s32 = sadd.s32 %s25, 1
      %s33 = ssub.s32 %s25, %s32
      %p34 = scmp.eq.s32.totalorder %s33, 0
      %s36 = sadd.s32 %s35, 1
      %s37 = scalar_select %p34, %s35, %s36
      %p40 = pneg %p34
      %p41 = scmp.eq.s32.totalorder %s25, 1
      %p42 = por %p40, %p41
      %p43 = scmp.ne.s32.totalorder %s35, %s38
      %p44 = scmp.eq.s32.totalorder %s25, 0
      %p45 = por %p43, %p44
      %p46 = scmp.ne.s32.totalorder %s35, %s38
      %p47 = scmp.eq.s32.totalorder %s30, 1
      %p48 = por %p46, %p47
      %p49 = scmp.ne.s32.totalorder %s38, %s39
      %p50 = scmp.eq.s32.totalorder %s30, 0
      %p51 = por %p49, %p50
      %p52 = scmp.ne.s32.totalorder %s38, %s39
      %p53 = scmp.eq.s32.totalorder %s31, 1
      %p54 = por %p52, %p53
      %p56 = scmp.ne.s32.totalorder %s39, %s55
      %p57 = scmp.eq.s32.totalorder %s31, 0
      %p58 = por %p56, %p57
      %s60 = sadd.s32 %s59, 1
      %p63 = scmp.eq.s32.totalorder %s25, 1
      %p64 = scmp.ne.s32.totalorder %s59, %s61
      %p65 = scmp.eq.s32.totalorder %s25, 0
      %p66 = por %p64, %p65
      %p67 = scmp.ne.s32.totalorder %s59, %s61
      %p68 = scmp.eq.s32.totalorder %s30, 1
      %p69 = por %p67, %p68
      %p70 = scmp.ne.s32.totalorder %s61, %s62
      %p71 = scmp.eq.s32.totalorder %s30, 0
      %p72 = por %p70, %p71
      %p73 = scmp.ne.s32.totalorder %s61, %s62
      %p74 = scmp.eq.s32.totalorder %s31, 1
      %p75 = por %p73, %p74
      %p77 = scmp.ne.s32.totalorder %s62, %s76
      %p78 = scmp.eq.s32.totalorder %s31, 0
      %p79 = por %p77, %p78
      %s81 = sadd.s32 %s80, 1
      %p84 = scmp.eq.s32.totalorder %s25, 1
      %p85 = scmp.ne.s32.totalorder %s80, %s82
      %p86 = scmp.eq.s32.totalorder %s25, 0
      %p87 = por %p85, %p86
      %p88 = scmp.ne.s32.totalorder %s80, %s82
      %p89 = scmp.eq.s32.totalorder %s30, 1
      %p90 = por %p88, %p89
      %p91 = scmp.ne.s32.totalorder %s82, %s83
      %p92 = scmp.eq.s32.totalorder %s30, 0
      %p93 = por %p91, %p92
      %p94 = scmp.ne.s32.totalorder %s82, %s83
      %p95 = scmp.eq.s32.totalorder %s31, 1
      %p96 = por %p94, %p95
      %p98 = scmp.ne.s32.totalorder %s83, %s97
      %p99 = scmp.eq.s32.totalorder %s31, 0
      %p100 = por %p98, %p99
      %s102 = sadd.s32 %s101, 1
      %p105 = scmp.eq.s32.totalorder %s25, 1
      %p106 = scmp.ne.s32.totalorder %s101, %s103
      %p107 = scmp.eq.s32.totalorder %s25, 0
      %p108 = por %p106, %p107
      %p109 = scmp.ne.s32.totalorder %s101, %s103
      %p110 = scmp.eq.s32.totalorder %s30, 1
      %p111 = por %p109, %p110
      %p112 = scmp.ne.s32.totalorder %s103, %s104
      %p113 = scmp.eq.s32.totalorder %s30, 0
      %p114 = por %p112, %p113
      %p115 = scmp.ne.s32.totalorder %s103, %s104
      %p116 = scmp.eq.s32.totalorder %s31, 1
      %p117 = por %p115, %p116
      %p119 = scmp.ne.s32.totalorder %s104, %s118
      %p120 = scmp.eq.s32.totalorder %s31, 0
      %p121 = por %p119, %p120
      %s123 = sadd.s32 %s122, 1
      %p126 = scmp.eq.s32.totalorder %s25, 1
      %p127 = scmp.ne.s32.totalorder %s122, %s124
      %p128 = scmp.eq.s32.totalorder %s25, 0
      %p129 = por %p127, %p128
      %p130 = scmp.ne.s32.totalorder %s122, %s124
      %p131 = scmp.eq.s32.totalorder %s30, 1
      %p132 = por %p130, %p131
      %p133 = scmp.ne.s32.totalorder %s124, %s125
      %p134 = scmp.eq.s32.totalorder %s30, 0
      %p135 = por %p133, %p134
      %p136 = scmp.ne.s32.totalorder %s124, %s125
      %p137 = scmp.eq.s32.totalorder %s31, 1
      %p138 = por %p136, %p137
      %p140 = scmp.ne.s32.totalorder %s125, %s139
      %p141 = scmp.eq.s32.totalorder %s31, 0
      %p142 = por %p140, %p141
      %s143 = ssub.s32 %s25, %s32
      %p144 = scmp.eq.s32.totalorder %s143, 0
      %s146 = sadd.s32 %s145, 1
      %s147 = scalar_select %p144, %s145, %s146
      %p150 = pneg %p144
      %p151 = scmp.eq.s32.totalorder %s25, 1
      %p152 = por %p150, %p151
      %p153 = scmp.ne.s32.totalorder %s145, %s148
      %p154 = scmp.eq.s32.totalorder %s25, 0
      %p155 = por %p153, %p154
      %p156 = scmp.ne.s32.totalorder %s145, %s148
      %p157 = scmp.eq.s32.totalorder %s30, 1
      %p158 = por %p156, %p157
      %p159 = scmp.ne.s32.totalorder %s148, %s149
      %p160 = scmp.eq.s32.totalorder %s30, 0
      %p161 = por %p159, %p160
      %p162 = scmp.ne.s32.totalorder %s148, %s149
      %p163 = scmp.eq.s32.totalorder %s31, 1
      %p164 = por %p162, %p163
      %p166 = scmp.ne.s32.totalorder %s149, %s165
      %p167 = scmp.eq.s32.totalorder %s31, 0
      %p168 = por %p166, %p167
      %s169 = ssub.s32 %s25, %s32
      %p170 = scmp.eq.s32.totalorder %s169, 0
      %s172 = sadd.s32 %s171, 1
      %s173 = scalar_select %p170, %s171, %s172
      %p176 = pneg %p170
      %p177 = scmp.eq.s32.totalorder %s25, 1
      %p178 = por %p176, %p177
      %p179 = scmp.ne.s32.totalorder %s171, %s174
      %p180 = scmp.eq.s32.totalorder %s25, 0
      %p181 = por %p179, %p180
      %p182 = scmp.ne.s32.totalorder %s171, %s174
      %p183 = scmp.eq.s32.totalorder %s30, 1
      %p184 = por %p182, %p183
      %p185 = scmp.ne.s32.totalorder %s174, %s175
      %p186 = scmp.eq.s32.totalorder %s30, 0
      %p187 = por %p185, %p186
      %p188 = scmp.ne.s32.totalorder %s174, %s175
      %p189 = scmp.eq.s32.totalorder %s31, 1
      %p190 = por %p188, %p189
      %p192 = scmp.ne.s32.totalorder %s175, %s191
      %p193 = scmp.eq.s32.totalorder %s31, 0
      %p194 = por %p192, %p193
      %s195 = ssub.s32 %s25, %s32
      %p196 = scmp.eq.s32.totalorder %s195, 0
      %s198 = sadd.s32 %s197, 1
      %s199 = scalar_select %p196, %s197, %s198
      %p202 = pneg %p196
      %p203 = scmp.eq.s32.totalorder %s25, 1
      %p204 = por %p202, %p203
      %p205 = scmp.ne.s32.totalorder %s197, %s200
      %p206 = scmp.eq.s32.totalorder %s25, 0
      %p207 = por %p205, %p206
      %p208 = scmp.ne.s32.totalorder %s197, %s200
      %p209 = scmp.eq.s32.totalorder %s30, 1
      %p210 = por %p208, %p209
      %p211 = scmp.ne.s32.totalorder %s200, %s201
      %p212 = scmp.eq.s32.totalorder %s30, 0
      %p213 = por %p211, %p212
      %p214 = scmp.ne.s32.totalorder %s200, %s201
      %p215 = scmp.eq.s32.totalorder %s31, 1
      %p216 = por %p214, %p215
      %p218 = scmp.ne.s32.totalorder %s201, %s217
      %p219 = scmp.eq.s32.totalorder %s31, 0
      %p220 = por %p218, %p219
      %p221 = scmp.le.s32.totalorder 1, %s25
      %p222 = scmp.lt.s32.totalorder %s25, 3
      %p223 = pnand %p221, %p222
      %p224 = pneg %p223
      // Predicated region
      $region9: #{tpu_custom_call.1} parent=5 // pred_check
        _
      $region10: #{tpu_custom_call.1} parent=5 // pred_check_branch
        %226 = sbr.rel (%p223) target = $region12
      $region11: #{tpu_custom_call.1} parent=5 // pred_region
        %s227 = ssub.s32 %s25, 1
        // Predicated region
        $region13: #{tpu_custom_call.1} parent=11 // pred_check
          %p228 = pneg %p72
        $region14: #{tpu_custom_call.1} parent=11 // pred_check_branch
          %230 = sbr.rel (%p228) target = $region16
        $region15: #{tpu_custom_call.1} parent=11 // pred_region
          %s232 = ssub.s32 256, 256
          %233 = vsyncadd [#allocation6], %s232
          %s234 = sshll.u32 [#allocation5], 4
          %s235 = int_to_ptr.vmem [resolvable:$true] %s234
          %240 = dma.hbm_to_vmem [thread:$0]  %s1, 256, %s235, [#allocation6], 64, 64, 4
        $region16: #{tpu_custom_call.1} parent=11 // pred_fallthru
          _
        // Predicated region
        $region17: #{tpu_custom_call.1} parent=11 // pred_check
          %p241 = pneg %p93
        $region18: #{tpu_custom_call.1} parent=11 // pred_check_branch
          %243 = sbr.rel (%p241) target = $region20
        $region19: #{tpu_custom_call.1} parent=11 // pred_region
          %s245 = ssub.s32 16, 16
          %246 = vsyncadd [#allocation6], %s245
          %s248 = sshll.u32 [#allocation7], 4
          %s249 = int_to_ptr.vmem [resolvable:$true] %s248
          %251 = dma.hbm_to_vmem [thread:$0]  %s2, 16, %s249, [#allocation6]
        $region20: #{tpu_custom_call.1} parent=11 // pred_fallthru
          _
        // Predicated region
        $region21: #{tpu_custom_call.1} parent=11 // pred_check
          %p252 = pneg %p114
        $region22: #{tpu_custom_call.1} parent=11 // pred_check_branch
          %254 = sbr.rel (%p252) target = $region24
        $region23: #{tpu_custom_call.1} parent=11 // pred_region
          %s256 = ssub.s32 128, 128
          %257 = vsyncadd [#allocation9], %s256
          %s259 = sshll.u32 [#allocation8], 4
          %s260 = int_to_ptr.vmem [resolvable:$true] %s259
          %262 = dma.hbm_to_vmem [thread:$0]  %s3, 128, %s260, [#allocation9]
        $region24: #{tpu_custom_call.1} parent=11 // pred_fallthru
          _
        // Predicated region
        $region25: #{tpu_custom_call.1} parent=11 // pred_check
          %p263 = pneg %p135
        $region26: #{tpu_custom_call.1} parent=11 // pred_check_branch
          %265 = sbr.rel (%p263) target = $region28
        $region27: #{tpu_custom_call.1} parent=11 // pred_region
          %s267 = ssub.s32 128, 128
          %268 = vsyncadd [#allocation9], %s267
          %s270 = sshll.u32 [#allocation10], 4
          %s271 = int_to_ptr.vmem [resolvable:$true] %s270
          %273 = dma.hbm_to_vmem [thread:$0]  %s4, 128, %s271, [#allocation9]
        $region28: #{tpu_custom_call.1} parent=11 // pred_fallthru
          _
      $region12: #{tpu_custom_call.1} parent=5 // pred_fallthru
        _
      %p274 = scmp.lt.s32.totalorder %s25, 2
      // Predicated region
      $region29: #{tpu_custom_call.1} parent=5 // pred_check
        %p275 = pneg %p274
      $region30: #{tpu_custom_call.1} parent=5 // pred_check_branch
        %277 = sbr.rel (%p275) target = $region32
      $region31: #{tpu_custom_call.1} parent=5 // pred_region
        // Predicated region
        $region33: #{tpu_custom_call.1} parent=31 // pred_check
          %p278 = pneg %p45
        $region34: #{tpu_custom_call.1} parent=31 // pred_check_branch
          %280 = sbr.rel (%p278) target = $region36
        $region35: #{tpu_custom_call.1} parent=31 // pred_region
          %s281 = sand.u32 %s35, 1
          %s282 = scalar_lea.sflag [#allocation3], %s281
          %s283 = sand.u32 %s35, 1
          %s284 = smul.addr %s283, 8
          %s285 = scalar_lea.vmem [#allocation2], %s284
          %s287 = ssub.s32 128, 128
          %288 = vsyncadd %s282, %s287
          %s289 = smul.addr %s25, 128
          %s290 = scalar_lea.hbm %s0, %s289
          %s292 = sshll.u32 %s285, 4
          %s293 = int_to_ptr.vmem [resolvable:$true] %s292
          %295 = dma.hbm_to_vmem [thread:$0]  %s290, 128, %s293, %s282
        $region36: #{tpu_custom_call.1} parent=31 // pred_fallthru
          _
      $region32: #{tpu_custom_call.1} parent=5 // pred_fallthru
        _
      %p296 = scmp.le.s32.totalorder 1, %s25
      %p297 = scmp.lt.s32.totalorder %s25, 3
      %p298 = pnand %p296, %p297
      %p299 = pneg %p298
      // Predicated region
      $region37: #{tpu_custom_call.1} parent=5 // pred_check
        _
      $region38: #{tpu_custom_call.1} parent=5 // pred_check_branch
        %301 = sbr.rel (%p298) target = $region40
      $region39: #{tpu_custom_call.1} parent=5 // pred_region
        %s302 = ssub.s32 %s25, 1
        %s303 = sand.u32 %s38, 1
        %s304 = scalar_lea.sflag [#allocation3], %s303
        %s305 = sand.u32 %s38, 1
        %s306 = smul.addr %s305, 8
        %s307 = scalar_lea.vmem [#allocation2], %s306
        // Predicated region
        $region41: #{tpu_custom_call.1} parent=39 // pred_check
          %p308 = pneg %p51
        $region42: #{tpu_custom_call.1} parent=39 // pred_check_branch
          %310 = sbr.rel (%p308) target = $region44
        $region43: #{tpu_custom_call.1} parent=39 // pred_region
          %311 = dma.done %s304, 128
        $region44: #{tpu_custom_call.1} parent=39 // pred_fallthru
          _
        // Predicated region
        $region45: #{tpu_custom_call.1} parent=39 // pred_check
          %p312 = pneg %p72
        $region46: #{tpu_custom_call.1} parent=39 // pred_check_branch
          %314 = sbr.rel (%p312) target = $region48
        $region47: #{tpu_custom_call.1} parent=39 // pred_region
          %315 = dma.done [#allocation6], 256
        $region48: #{tpu_custom_call.1} parent=39 // pred_fallthru
          _
        // Predicated region
        $region49: #{tpu_custom_call.1} parent=39 // pred_check
          %p316 = pneg %p93
        $region50: #{tpu_custom_call.1} parent=39 // pred_check_branch
          %318 = sbr.rel (%p316) target = $region52
        $region51: #{tpu_custom_call.1} parent=39 // pred_region
          %319 = dma.done [#allocation6], 16
        $region52: #{tpu_custom_call.1} parent=39 // pred_fallthru
          _
        // Predicated region
        $region53: #{tpu_custom_call.1} parent=39 // pred_check
          %p320 = pneg %p114
        $region54: #{tpu_custom_call.1} parent=39 // pred_check_branch
          %322 = sbr.rel (%p320) target = $region56
        $region55: #{tpu_custom_call.1} parent=39 // pred_region
          %323 = dma.done [#allocation9], 128
        $region56: #{tpu_custom_call.1} parent=39 // pred_fallthru
          _
        // Predicated region
        $region57: #{tpu_custom_call.1} parent=39 // pred_check
          %p324 = pneg %p135
        $region58: #{tpu_custom_call.1} parent=39 // pred_check_branch
          %326 = sbr.rel (%p324) target = $region60
        $region59: #{tpu_custom_call.1} parent=39 // pred_region
          %327 = dma.done [#allocation9], 128
        $region60: #{tpu_custom_call.1} parent=39 // pred_fallthru
          _
        %s328 = sand.u32 %s38, 1
        %s329 = scalar_lea.sflag [#allocation3], %s328
        %s330 = sand.u32 %s38, 1
        %s331 = smul.addr %s330, 8
        %s332 = scalar_lea.vmem [#allocation2], %s331
        %p333 = pneg %p51
        %p334 = pneg %p48
        %p335 = pneg %p72
        %p336 = pneg %p69
        %p337 = pneg %p93
        %p338 = pneg %p90
        %p339 = pneg %p114
        %p340 = pneg %p111
        %p341 = pneg %p135
        %p342 = pneg %p132
        %p343 = pneg %p161
        %p344 = pneg %p158
        %s345 = sand.u32 %s148, 1
        %s346 = scalar_lea.sflag [#allocation4], %s345
        %s347 = sand.u32 %s148, 1
        %s348 = smul.addr %s347, 4
        %s349 = scalar_lea.vmem [#allocation11], %s348
        %p350 = pneg %p187
        %p351 = pneg %p184
        %s352 = sand.u32 %s30, 1
        %s353 = scalar_lea.sflag [#allocation13], %s352
        %s354 = sand.u32 %s174, 1
        %s355 = smul.addr %s354, 4
        %s356 = scalar_lea.vmem [#allocation12], %s355
        %p357 = pneg %p213
        %p358 = pneg %p210
        %s359 = sand.u32 %s30, 1
        %s360 = scalar_lea.sflag [#allocation13], %s359
        %s361 = sand.u32 %s200, 1
        %s362 = smul.addr %s361, 4
        %s363 = scalar_lea.vmem [#allocation14], %s362
        %v365 = vld [vmem:[%s307] sm:$0xff]
        %v366 = vpack.c.bf16 %v365, %v365
        %v367 = vld [vmem:[#allocation5] sm:$0xf]
        %v368 = vld [vmem:[#allocation5 + $0x4] sm:$0xf]
        %v369 = vld [vmem:[#allocation5 + $0x8] sm:$0xf]
        %v370 = vld [vmem:[#allocation5 + $0xc] sm:$0xf]
        %v371 = vld [vmem:[#allocation7] sm:$0x1]
        %v373 = vlaneseq
        %v374 = vshrl.u32 %v373, 7
        %v375 = vsub.s32 0, %v374
        %v376 = vrot.slane %v371, %v375
        %v382 = vunpack.c.l.b16 %v367
        %v383 = vunpack.c.l.b16 %v368
        %v384 = vunpack.c.l.b16 %v369
        %v385 = vunpack.c.l.b16 %v370
        %v386 = vpack.c.b16 %v383, %v382
        %v387 = vpack.c.b16 %v385, %v384
        %vm390 = vcmask 261120
        %v392 = vsel %vm390, %v366, 0
        %394 = vmatprep.subr.bf16.mxu0 0
        %395 = vmatpush1.bf16.msra.mxu0 %v386
        %396 = vmatprep.subr.bf16.mxu0 0
        %397 = vmatpush1.bf16.msra.mxu0 %v387
        %398 = vmatprep.subr.bf16.mxu0 0
        %399 = vmatpush1.bf16.msra.mxu0 0
        %400 = vmatprep.subr.bf16.mxu0 0
        %401 = vmatpush1.bf16.msra.mxu0 0
        %402 = vmatprep.subr.bf16.mxu0 0
        %403 = vmatpush1.bf16.msra.mxu0 0
        %404 = vmatprep.subr.bf16.mxu0 0
        %405 = vmatpush1.bf16.msra.mxu0 0
        %406 = vmatprep.subr.bf16.mxu0 0
        %407 = vmatpush1.bf16.msra.mxu0 0
        %408 = vmatprep.subr.bf16.mxu0 0
        %409 = vmatpush1.bf16.msra.mxu0 0
        %410 = vmatprep.subr.bf16.mxu0 0
        %411 = vmatpush1.bf16.msra.mxu0 0
        %412 = vmatprep.subr.bf16.mxu0 0
        %413 = vmatpush1.bf16.msra.mxu0 0
        %414 = vmatprep.subr.bf16.mxu0 0
        %415 = vmatpush1.bf16.msra.mxu0 0
        %416 = vmatprep.subr.bf16.mxu0 0
        %417 = vmatpush1.bf16.msra.mxu0 0
        %418 = vmatprep.subr.bf16.mxu0 0
        %419 = vmatpush1.bf16.msra.mxu0 0
        %420 = vmatprep.subr.bf16.mxu0 0
        %421 = vmatpush1.bf16.msra.mxu0 0
        %422 = vmatprep.subr.bf16.mxu0 0
        %423 = vmatpush1.bf16.msra.mxu0 0
        %424 = vmatprep.subr.bf16.mxu0 0
        %425 = vmatpush1.bf16.msra.mxu0 0
        %426 = vmatprep.mubr.bf16.mxu0 0
        %427 = vmatmul.mubr.bf16.gmra.mrb[0].mxu0 %v392
        %v428 = vpop.f32.mrb[0].mxu0
        %v429 = vadd.f32 %v376, %v428
        %v430 = vpop.f32.mrb[0].mxu0
        %v431 = vpop.f32.mrb[0].mxu0
        %v432 = vpop.f32.mrb[0].mxu0
        %433 = vdwg.mxu0
        %v434 = vld [vmem:[#allocation8] sm:$0xff]
        %v435 = vld [vmem:[#allocation10] sm:$0xff]
        %437 = vrot.lane.b32.xlu0 %v429, 124
        %v438 = vpop.permute.xlu0 %437
        %440 = vrot.lane.b32.xlu0 %v429, 4
        %v441 = vpop.permute.xlu0 %440
        %vm443 = vcmask 31744
        %v444 = vsel %vm443, %v438, %v441
        %vm445 = vcmask 64512
        %v446 = vsel %vm445, %v444, %v438
        %vm447 = vcmask 97280
        %v448 = vsel %vm447, %v446, %v441
        %vm449 = vcmask 130048
        %v450 = vsel %vm449, %v448, %v438
        %vm451 = vcmask 162816
        %v452 = vsel %vm451, %v450, %v441
        %vm453 = vcmask 195584
        %v454 = vsel %vm453, %v452, %v438
        %vm455 = vcmask 228352
        %v456 = vsel %vm455, %v454, %v441
        %v457 = vmul.f32 %v429, %v434
        %v458 = vmul.f32 %v456, %v435
        %v459 = vadd.f32 %v457, %v458
        %v460 = vpack.c.bf16 %v459, %v459
        %vm461 = vcmask 257024
        %462 = vst.msk [vmem:[%s349] sm:$0xf] %vm461, %v460
        %463 = vrot.lane.b32.xlu0 %v429, 92
        %v464 = vpop.permute.xlu0 %463
        %466 = vrot.lane.b32.xlu0 %v429, 100
        %v467 = vpop.permute.xlu0 %466
        %v469 = vsel %vm443, %v464, %v467
        %v470 = vsel %vm445, %v469, %v464
        %v471 = vsel %vm447, %v470, %v467
        %v472 = vsel %vm449, %v471, %v464
        %v473 = vsel %vm451, %v472, %v467
        %v474 = vsel %vm453, %v473, %v464
        %v475 = vsel %vm455, %v474, %v467
        %477 = vrot.lane.b32.xlu0 %v434, 32
        %v478 = vpop.permute.xlu0 %477
        %v480 = vmul.f32 %v429, %v478
        %v481 = vmul.f32 %v475, %v435
        %483 = vrot.lane.b32.xlu0 %v481, 32
        %v484 = vpop.permute.xlu0 %483
        %v486 = vadd.f32 %v480, %v484
        %v487 = vpack.c.bf16 %v486, %v486
        %v489 = vunpack.c.l.b16 %v487
        %v490 = vpack.c.b16 %v489, %v489
        %491 = vrot.lane.b32.xlu0 %v490, 96
        %v492 = vpop.permute.xlu0 %491
        %494 = vst.msk [vmem:[%s356] sm:$0xf] %vm461, %v492
        %v495 = vpack.c.bf16 %v429, %v429
        %v497 = vunpack.c.l.b16 %v495
        %v498 = vpack.c.b16 %v497, %v497
        %499 = vrot.lane.b32.xlu0 %v498, 64
        %v500 = vpop.permute.xlu0 %499
        %502 = vst.msk [vmem:[%s363] sm:$0xf] %vm461, %v500
        %s503 = sand.u32 %s148, 1
        %s504 = scalar_lea.sflag [#allocation4], %s503
        %s505 = sand.u32 %s148, 1
        %s506 = smul.addr %s505, 4
        %s507 = scalar_lea.vmem [#allocation11], %s506
        %s508 = sand.u32 %s30, 1
        %s509 = scalar_lea.sflag [#allocation13], %s508
        %s510 = sand.u32 %s174, 1
        %s511 = smul.addr %s510, 4
        %s512 = scalar_lea.vmem [#allocation12], %s511
        %s513 = sand.u32 %s30, 1
        %s514 = scalar_lea.sflag [#allocation13], %s513
        %s515 = sand.u32 %s200, 1
        %s516 = smul.addr %s515, 4
        %s517 = scalar_lea.vmem [#allocation14], %s516
        // Predicated region
        $region61: #{tpu_custom_call.1} parent=39 // pred_check
          %p518 = pneg %p158
        $region62: #{tpu_custom_call.1} parent=39 // pred_check_branch
          %520 = sbr.rel (%p518) target = $region64
        $region63: #{tpu_custom_call.1} parent=39 // pred_region
          %s522 = ssub.s32 64, 64
          %523 = vsyncadd %s504, %s522
          %s524 = smul.addr %s30, 64
          %s525 = scalar_lea.hbm %s5, %s524
          %s527 = sshll.u32 %s507, 4
          %s528 = int_to_ptr.vmem [resolvable:$true] %s527
          %530 = dma.vmem_to_hbm [thread:$0]  %s528, 64, %s525, %s504
        $region64: #{tpu_custom_call.1} parent=39 // pred_fallthru
          _
        // Predicated region
        $region65: #{tpu_custom_call.1} parent=39 // pred_check
          %p531 = pneg %p184
        $region66: #{tpu_custom_call.1} parent=39 // pred_check_branch
          %533 = sbr.rel (%p531) target = $region68
        $region67: #{tpu_custom_call.1} parent=39 // pred_region
          %s535 = ssub.s32 64, 64
          %536 = vsyncadd %s509, %s535
          %s537 = smul.addr %s30, 64
          %s538 = scalar_lea.hbm %s6, %s537
          %s540 = sshll.u32 %s512, 4
          %s541 = int_to_ptr.vmem [resolvable:$true] %s540
          %543 = dma.vmem_to_hbm [thread:$0]  %s541, 64, %s538, %s509
        $region68: #{tpu_custom_call.1} parent=39 // pred_fallthru
          _
        // Predicated region
        $region69: #{tpu_custom_call.1} parent=39 // pred_check
          %p544 = pneg %p210
        $region70: #{tpu_custom_call.1} parent=39 // pred_check_branch
          %546 = sbr.rel (%p544) target = $region72
        $region71: #{tpu_custom_call.1} parent=39 // pred_region
          %s548 = ssub.s32 64, 64
          %549 = vsyncadd %s514, %s548
          %s550 = smul.addr %s30, 64
          %s551 = scalar_lea.hbm %s7, %s550
          %s553 = sshll.u32 %s517, 4
          %s554 = int_to_ptr.vmem [resolvable:$true] %s553
          %556 = dma.vmem_to_hbm [thread:$0]  %s554, 64, %s551, %s514
        $region72: #{tpu_custom_call.1} parent=39 // pred_fallthru
          _
      $region40: #{tpu_custom_call.1} parent=5 // pred_fallthru
        _
      %p557 = scmp.le.s32.totalorder 2, %s25
      // Predicated region
      $region73: #{tpu_custom_call.1} parent=5 // pred_check
        %p558 = pneg %p557
      $region74: #{tpu_custom_call.1} parent=5 // pred_check_branch
        %560 = sbr.rel (%p558) target = $region76
      $region75: #{tpu_custom_call.1} parent=5 // pred_region
        %s561 = ssub.s32 %s25, 2
        // Predicated region
        $region77: #{tpu_custom_call.1} parent=75 // pred_check
          %p562 = pneg %p164
        $region78: #{tpu_custom_call.1} parent=75 // pred_check_branch
          %564 = sbr.rel (%p562) target = $region80
        $region79: #{tpu_custom_call.1} parent=75 // pred_region
          %s565 = sand.u32 %s149, 1
          %s566 = scalar_lea.sflag [#allocation4], %s565
          %s567 = sand.u32 %s149, 1
          %s568 = smul.addr %s567, 4
          %s569 = scalar_lea.vmem [#allocation11], %s568
          %570 = dma.done %s566, 64
        $region80: #{tpu_custom_call.1} parent=75 // pred_fallthru
          _
        // Predicated region
        $region81: #{tpu_custom_call.1} parent=75 // pred_check
          %p571 = pneg %p190
        $region82: #{tpu_custom_call.1} parent=75 // pred_check_branch
          %573 = sbr.rel (%p571) target = $region84
        $region83: #{tpu_custom_call.1} parent=75 // pred_region
          %s574 = sand.u32 %s31, 1
          %s575 = scalar_lea.sflag [#allocation13], %s574
          %s576 = sand.u32 %s175, 1
          %s577 = smul.addr %s576, 4
          %s578 = scalar_lea.vmem [#allocation12], %s577
          %579 = dma.done %s575, 64
        $region84: #{tpu_custom_call.1} parent=75 // pred_fallthru
          _
        // Predicated region
        $region85: #{tpu_custom_call.1} parent=75 // pred_check
          %p580 = pneg %p216
        $region86: #{tpu_custom_call.1} parent=75 // pred_check_branch
          %582 = sbr.rel (%p580) target = $region88
        $region87: #{tpu_custom_call.1} parent=75 // pred_region
          %s583 = sand.u32 %s31, 1
          %s584 = scalar_lea.sflag [#allocation13], %s583
          %s585 = sand.u32 %s201, 1
          %s586 = smul.addr %s585, 4
          %s587 = scalar_lea.vmem [#allocation14], %s586
          %588 = dma.done %s584, 64
        $region88: #{tpu_custom_call.1} parent=75 // pred_fallthru
          _
      $region76: #{tpu_custom_call.1} parent=5 // pred_fallthru
        _
    $region6: #{tpu_custom_call.1} parent=1 // loop_footer
      %s29 = sadd.s32 1, %s25
    $region7: #{tpu_custom_call.1} parent=1 // loop_footer_branch
      %24 = sbr.rel target = $region3
    $region8: #{tpu_custom_call.1} parent=1 // loop_exit
      _
    %589 = vsyncpa [#allocation3], 1
    %s590 = scalar_lea.sflag [#allocation3], 1
    %591 = vsyncpa %s590, 1
    %592 = vsyncpa [#allocation6], 1
    %593 = vsyncpa [#allocation9], 1
    %594 = vsyncpa [#allocation4], 1
    %s595 = scalar_lea.sflag [#allocation4], 1
    %596 = vsyncpa %s595, 1
    %597 = vsyncpa [#allocation13], 1
    %s598 = scalar_lea.sflag [#allocation13], 1
    %599 = vsyncpa %s598, 1

</llo_original>
